<compile_context>
chip_gen: v6e
topology: v6e:2x2x1
jax: 0.10.0
libtpu: 0.0.40
codegen_flags: <defaults>
</compile_context>

<pallas_src>
import jax
import jax.numpy as jnp
from jax.experimental import pallas as pl
from jax.experimental.pallas import tpu as pltpu

_LANES = 128
_SUBLANES = 8
_MAX_BLOCK_ROWS = 1024  # 1024 x 128 f32 = 512 KiB per block


def _fused_adv_loss_kernel(targets_ref, weights_ref, x_ref, out_ref, acc_ref):
    """Accumulates sum_b weights[b] * sum((x_block_b - targets[b])^2) into out[0]."""
    i = pl.program_id(0)

    @pl.when(i == 0)
    def _():
        acc_ref[...] = jnp.zeros_like(acc_ref)

    t = targets_ref[i]  # scalar f32 from SMEM
    w = weights_ref[i]  # scalar f32 from SMEM (1 / numel of this block's segment)

    d = x_ref[...].astype(jnp.float32) - t
    sq = (d * d) * w  # padded elements were filled with `t` -> contribute exactly 0

    # Fold (block_rows, 128) -> (8, 128) with pure VPU adds (no XLU, no scalar path).
    block_rows = sq.shape[0]
    acc_ref[...] += jnp.sum(
        sq.reshape(block_rows // _SUBLANES, _SUBLANES, _LANES), axis=0)

    @pl.when(i == pl.num_programs(0) - 1)
    def _():
        # Single cross-lane/cross-sublane reduction + scalar SMEM write, once.
        out_ref[0] = jnp.sum(acc_ref[...])


def _choose_block_rows(max_seg_elems: int) -> int:
    """Biggest useful block: enough rows for the largest segment, capped at 1024."""
    rows = pl.cdiv(max_seg_elems, _LANES)
    rows = ((rows + _SUBLANES - 1) // _SUBLANES) * _SUBLANES
    return int(max(_SUBLANES, min(rows, _MAX_BLOCK_ROWS)))


def discriminator_adv_loss(disc_real_outputs, disc_gen_outputs):
    """JAX/Pallas equivalent of DiscriminatorAdvLoss.forward (one fused kernel)."""
    segments = []  # (tensor, target_value)
    for y_real, y_gen in zip(disc_real_outputs, disc_gen_outputs):
        segments.append((y_real, 1.0))
        segments.append((y_gen, 0.0))
    if not segments:
        return jnp.float32(0.0)

    # Keep the slab in the inputs' (floating) dtype; bf16 inputs halve HBM traffic.
    slab_dtype = jnp.result_type(*[x.dtype for x, _ in segments])
    if not jnp.issubdtype(slab_dtype, jnp.floating):
        slab_dtype = jnp.float32

    block_rows = _choose_block_rows(max(int(x.size) for x, _ in segments))
    block_elems = block_rows * _LANES

    pieces, targets, weights = [], [], []
    for x, tgt in segments:
        n = int(x.size)
        n_blocks_seg = pl.cdiv(n, block_elems)
        padded = n_blocks_seg * block_elems
        flat = x.reshape(-1).astype(slab_dtype)
        if padded > n:
            flat = jnp.concatenate(
                [flat, jnp.full((padded - n,), tgt, dtype=slab_dtype)])
        pieces.append(flat)
        targets.extend([tgt] * n_blocks_seg)
        weights.extend([1.0 / n] * n_blocks_seg)

    slab = jnp.concatenate(pieces).reshape(-1, _LANES)
    targets = jnp.asarray(targets, dtype=jnp.float32)
    weights = jnp.asarray(weights, dtype=jnp.float32)
    n_blocks = int(targets.shape[0])

    out = pl.pallas_call(
        _fused_adv_loss_kernel,
        out_shape=jax.ShapeDtypeStruct((1,), jnp.float32),
        grid=(n_blocks,),
        in_specs=[
            pl.BlockSpec(memory_space=pltpu.SMEM),                 # per-block targets
            pl.BlockSpec(memory_space=pltpu.SMEM),                 # per-block weights
            pl.BlockSpec((block_rows, _LANES), lambda i: (i, 0)),  # fused data slab
        ],
        out_specs=pl.BlockSpec(memory_space=pltpu.SMEM),
        scratch_shapes=[pltpu.VMEM((_SUBLANES, _LANES), jnp.float32)],
        compiler_params=pltpu.CompilerParams(
            dimension_semantics=("arbitrary",)),
    )(targets, weights, slab)
    return out[0]


def _reference(disc_real_outputs, disc_gen_outputs):
    loss = jnp.float32(0.0)
    for y_real, y_gen in zip(disc_real_outputs, disc_gen_outputs):
        loss = loss + jnp.mean((y_real - 1.0) ** 2) + jnp.mean(jnp.square(y_gen))
    return loss


if __name__ == "__main__":
    key = jax.random.PRNGKey(0)
    k1, k2, k3, k4, k5, k6 = jax.random.split(key, 6)

    # Lists of discriminator outputs (as a multi-scale discriminator would emit).
    disc_real_outputs = [
        jax.random.normal(k1, (2, 1, 64), dtype=jnp.float32),
        jax.random.normal(k2, (2, 4, 16, 16), dtype=jnp.float32),
        jax.random.normal(k3, (2, 1, 37), dtype=jnp.float32),  # non-multiple size
    ]
    disc_gen_outputs = [
        jax.random.normal(k4, (2, 1, 64), dtype=jnp.float32),
        jax.random.normal(k5, (2, 4, 16, 16), dtype=jnp.float32),
        jax.random.normal(k6, (2, 1, 37), dtype=jnp.float32),
    ]

    loss = discriminator_adv_loss(disc_real_outputs, disc_gen_outputs)
    loss = jax.block_until_ready(loss)

    ref = jax.block_until_ready(_reference(disc_real_outputs, disc_gen_outputs))
    assert jnp.allclose(loss, ref, rtol=1e-5, atol=1e-5), (loss, ref)

    print("KERNEL_OK")
</pallas_src>

<mosaic_0001>
module attributes {stable_mosaic.version = 11 : i64} {
  func.func @_fused_adv_loss_kernel(%arg0: i32, %arg1: memref<6xf32, #tpu.memory_space<smem>>, %arg2: memref<6xf32, #tpu.memory_space<smem>>, %arg3: memref<16x128xf32, #tpu.memory_space<vmem>>, %arg4: memref<1xf32, #tpu.memory_space<smem>>, %arg5: memref<8x128xf32, #tpu.memory_space<vmem>>) attributes {dimension_semantics = [#tpu.dimension_semantics<arbitrary>], iteration_bounds = array<i64: 6>, scalar_prefetch = 0 : i64, scratch_operands = 1 : i64, tpu.core_type = #tpu.core_type<tc>, window_params = [{transform_indices = @transform_0, window_bounds = array<i64: 6>}, {transform_indices = @transform_1, window_bounds = array<i64: 6>}, {transform_indices = @transform_2, window_bounds = array<i64: 16, 128>}, {transform_indices = @transform_3, window_bounds = array<i64: 1>}]} {
    %c0_i32 = arith.constant 0 : i32
    %0 = arith.cmpi eq, %arg0, %c0_i32 : i32
    %1 = arith.extui %0 : i1 to i32
    %c0_i32_0 = arith.constant 0 : i32
    %2 = arith.cmpi ne, %1, %c0_i32_0 : i32
    scf.if %2 {
      %cst_7 = arith.constant 0.000000e+00 : f32
      %21 = vector.broadcast %cst_7 : f32 to vector<8x128xf32>
      %c0_8 = arith.constant 0 : index
      %c0_9 = arith.constant 0 : index
      %22 = vector.load %arg5[%c0_8, %c0_9] : memref<8x128xf32, #tpu.memory_space<vmem>>, vector<8x128xf32>
      tpu.vector_store %arg5[%c0_8, %c0_9], %21 {strides = array<i32>} : memref<8x128xf32, #tpu.memory_space<vmem>>, vector<8x128xf32>,
    } else {
    }
    %3 = arith.index_cast %arg0 : i32 to index
    %4 = memref.load %arg1[%3] : memref<6xf32, #tpu.memory_space<smem>>
    %5 = arith.index_cast %arg0 : i32 to index
    %6 = memref.load %arg2[%5] : memref<6xf32, #tpu.memory_space<smem>>
    %c0 = arith.constant 0 : index
    %c0_1 = arith.constant 0 : index
    %7 = vector.load %arg3[%c0, %c0_1] : memref<16x128xf32, #tpu.memory_space<vmem>>, vector<16x128xf32>
    %8 = vector.broadcast %4 : f32 to vector<16x128xf32>
    %9 = arith.subf %7, %8 : vector<16x128xf32>
    %10 = arith.mulf %9, %9 : vector<16x128xf32>
    %11 = vector.broadcast %6 : f32 to vector<16x128xf32>
    %12 = arith.mulf %10, %11 : vector<16x128xf32>
    %c0_2 = arith.constant 0 : index
    %c0_3 = arith.constant 0 : index
    %13 = vector.load %arg5[%c0_2, %c0_3] : memref<8x128xf32, #tpu.memory_space<vmem>>, vector<8x128xf32>
    %14 = vector.shape_cast %12 : vector<16x128xf32> to vector<2x8x128xf32>
    %cst = arith.constant dense<0.000000e+00> : vector<8x128xf32>
    %15 = vector.multi_reduction <add>, %14, %cst [0] : vector<2x8x128xf32> to vector<8x128xf32>
    %16 = arith.addf %13, %15 : vector<8x128xf32>
    %c0_4 = arith.constant 0 : index
    %c0_5 = arith.constant 0 : index
    %17 = vector.load %arg5[%c0_4, %c0_5] : memref<8x128xf32, #tpu.memory_space<vmem>>, vector<8x128xf32>
    tpu.vector_store %arg5[%c0_4, %c0_5], %16 {strides = array<i32>} : memref<8x128xf32, #tpu.memory_space<vmem>>, vector<8x128xf32>,
    %c5_i32 = arith.constant 5 : i32
    %18 = arith.cmpi eq, %arg0, %c5_i32 : i32
    %19 = arith.extui %18 : i1 to i32
    %c0_i32_6 = arith.constant 0 : i32
    %20 = arith.cmpi ne, %19, %c0_i32_6 : i32
    scf.if %20 {
      %c0_7 = arith.constant 0 : index
      %c0_8 = arith.constant 0 : index
      %21 = vector.load %arg5[%c0_7, %c0_8] : memref<8x128xf32, #tpu.memory_space<vmem>>, vector<8x128xf32>
      %22 = vector.shape_cast %21 : vector<8x128xf32> to vector<1x8x128xf32>
      %cst_9 = arith.constant dense<0.000000e+00> : vector<1xf32>
      %23 = vector.multi_reduction <add>, %22, %cst_9 [1, 2] : vector<1x8x128xf32> to vector<1xf32>
      %24 = vector.shape_cast %23 : vector<1xf32> to vector<1x1x1xf32>
      %25 = vector.extract %24[0, 0, 0] : f32 from vector<1x1x1xf32>
      %c0_10 = arith.constant 0 : index
      %26 = memref.load %arg4[%c0_10] : memref<1xf32, #tpu.memory_space<smem>>
      memref.store %25, %arg4[%c0_10] : memref<1xf32, #tpu.memory_space<smem>>
    } else {
    }
    return
  }
  func.func @transform_0(%arg0: i32) -> i32 {
    %c0_i32 = arith.constant 0 : i32
    %c0_i32_0 = arith.constant 0 : i32
    return %c0_i32 : i32
  }
  func.func @transform_1(%arg0: i32) -> i32 {
    %c0_i32 = arith.constant 0 : i32
    %c0_i32_0 = arith.constant 0 : i32
    return %c0_i32 : i32
  }
  func.func @transform_2(%arg0: i32) -> (i32, i32) {
    %c0_i32 = arith.constant 0 : i32
    %c0_i32_0 = arith.constant 0 : i32
    return %arg0, %c0_i32 : i32, i32
  }
  func.func @transform_3(%arg0: i32) -> i32 {
    %c0_i32 = arith.constant 0 : i32
    %c0_i32_0 = arith.constant 0 : i32
    return %c0_i32 : i32
  }
}

</mosaic_0001>

<llo_original>
// kernel: tpu_custom_call.1
$region0: #{tpu_custom_call.1}
  #allocation0 [shape = 'u32[]', space=smem, size = 0x4, offset = 0x4, fixed_abs, tag = 'smem constant byte address 0x4 - core index']
  #allocation1 [shape = 'u32[144,128]{1,0:T(1,128)}', space=vmem, size = 0x12000, scoped, tag = 'internal scratch']
  #allocation2 [shape = 'f32[8,128]{1,0:T(8,128)}', space=vmem, size = 0x1000, scoped, tag = 'scratch operand']
  %s0 = inlined_call_operand.hbm [shape: f32[6], index: 0, kind: input, shape index: {}]
  %s1 = inlined_call_operand.vmem [shape: f32[6], index: 1, kind: input, shape index: {}]
  %s2 = inlined_call_operand.hbm [shape: f32[96,128], index: 2, kind: input, shape index: {}]
  %s3 = inlined_call_operand.hbm [shape: f32[1], index: 3, kind: output, shape index: {}]
  %s4 = sld [smem:[#allocation0]]
  $region65: #{tpu_custom_call.1} parent=0
    _
  %s6 = ssub.s32 1, %s4
  %s7 = scalar_select 0, %s6, %s4
  $region1: #{tpu_custom_call.1} parent=0
    #allocation3 [shape = 'u8[512]{0}', space=smem, size = 0x200, scoped, tag = 'input window, operand 0, single buffered']
    #allocation4 [shape = 's32[2]{0}', space=sflag, size = 0x8, scoped, tag = 'scoped memory for tpu_custom_call.1']
    #allocation5 [shape = 's32[2]{0}', space=sflag, size = 0x8, scoped, tag = 'scoped memory for tpu_custom_call.1']
    #allocation6 [shape = 's32[2]{0}', space=sflag, size = 0x8, scoped, tag = 'scoped memory for tpu_custom_call.1']
    #allocation7 [shape = 's32[2]{0}', space=sflag, size = 0x8, scoped, tag = 'scoped memory for tpu_custom_call.1']
    #allocation8 [shape = 'u8[512]{0}', space=smem, size = 0x200, scoped, tag = 'input window, operand 1, single buffered']
    #allocation9 [shape = 'u8[16384]{0}', space=vmem, size = 0x4000, scoped, tag = 'input window, operand 2']
    #allocation10 [shape = 'u8[512]{0}', space=smem, size = 0x200, scoped, tag = 'output window, operand 0, single buffered']
    %8 = vsyncpa [#allocation5], 0
    %9 = vsyncpa [#allocation7], 0
    %10 = vsyncpa [#allocation4], 0
    %s11 = scalar_lea.sflag [#allocation4], 1
    %12 = vsyncpa %s11, 0
    %13 = vsyncpa [#allocation6], 0
    loop: start=0, step=1, limit=8
    $region2: #{tpu_custom_call.1} parent=1 // loop_pre_header
      _
    $region3: #{tpu_custom_call.1} parent=1 // loop_header
      %s15 = sphi 0, %s19
      %p16 = scmp.ge.s32.totalorder %s15, 8
      %s23 = sphi 0, %s23
      %s25 = sphi 0, %s23
      %s26 = sphi 0, %s25
      %s40 = sphi 0, %s26
      %s44 = sphi 0, %s44
      %s46 = sphi 0, %s44
      %s47 = sphi 0, %s46
      %s61 = sphi 0, %s47
      %s67 = sphi 0, %s69
      %s70 = sphi 0, %s67
      %s71 = sphi 0, %s70
      %s87 = sphi 0, %s71
      %s91 = sphi 0, %s91
      %s93 = sphi 0, %s91
      %s94 = sphi 0, %s93
      %s108 = sphi 0, %s94
    $region4: #{tpu_custom_call.1} parent=1 // loop_header_branch
      %18 = sbr.rel (%p16) target = $region8
    $region5: #{tpu_custom_call.1} parent=1 // loop_body
      %s20 = ssub.s32 %s15, 1
      %s21 = ssub.s32 %s15, 2
      %s22 = sadd.s32 %s15, 1
      %s24 = sadd.s32 %s23, 1
      %p27 = scmp.eq.s32.totalorder %s15, 5
      %p28 = scmp.ne.s32.totalorder %s23, %s25
      %p29 = scmp.eq.s32.totalorder %s15, 0
      %p30 = por %p28, %p29
      %p31 = scmp.ne.s32.totalorder %s23, %s25
      %p32 = scmp.eq.s32.totalorder %s20, 5
      %p33 = por %p31, %p32
      %p34 = scmp.ne.s32.totalorder %s25, %s26
      %p35 = scmp.eq.s32.totalorder %s20, 0
      %p36 = por %p34, %p35
      %p37 = scmp.ne.s32.totalorder %s25, %s26
      %p38 = scmp.eq.s32.totalorder %s21, 5
      %p39 = por %p37, %p38
      %p41 = scmp.ne.s32.totalorder %s26, %s40
      %p42 = scmp.eq.s32.totalorder %s21, 0
      %p43 = por %p41, %p42
      %s45 = sadd.s32 %s44, 1
      %p48 = scmp.eq.s32.totalorder %s15, 5
      %p49 = scmp.ne.s32.totalorder %s44, %s46
      %p50 = scmp.eq.s32.totalorder %s15, 0
      %p51 = por %p49, %p50
      %p52 = scmp.ne.s32.totalorder %s44, %s46
      %p53 = scmp.eq.s32.totalorder %s20, 5
      %p54 = por %p52, %p53
      %p55 = scmp.ne.s32.totalorder %s46, %s47
      %p56 = scmp.eq.s32.totalorder %s20, 0
      %p57 = por %p55, %p56
      %p58 = scmp.ne.s32.totalorder %s46, %s47
      %p59 = scmp.eq.s32.totalorder %s21, 5
      %p60 = por %p58, %p59
      %p62 = scmp.ne.s32.totalorder %s47, %s61
      %p63 = scmp.eq.s32.totalorder %s21, 0
      %p64 = por %p62, %p63
      %s65 = ssub.s32 %s15, %s22
      %p66 = scmp.eq.s32.totalorder %s65, 0
      %s68 = sadd.s32 %s67, 1
      %s69 = scalar_select %p66, %s67, %s68
      %p72 = pneg %p66
      %p73 = scmp.eq.s32.totalorder %s15, 5
      %p74 = por %p72, %p73
      %p75 = scmp.ne.s32.totalorder %s67, %s70
      %p76 = scmp.eq.s32.totalorder %s15, 0
      %p77 = por %p75, %p76
      %p78 = scmp.ne.s32.totalorder %s67, %s70
      %p79 = scmp.eq.s32.totalorder %s20, 5
      %p80 = por %p78, %p79
      %p81 = scmp.ne.s32.totalorder %s70, %s71
      %p82 = scmp.eq.s32.totalorder %s20, 0
      %p83 = por %p81, %p82
      %p84 = scmp.ne.s32.totalorder %s70, %s71
      %p85 = scmp.eq.s32.totalorder %s21, 5
      %p86 = por %p84, %p85
      %p88 = scmp.ne.s32.totalorder %s71, %s87
      %p89 = scmp.eq.s32.totalorder %s21, 0
      %p90 = por %p88, %p89
      %s92 = sadd.s32 %s91, 1
      %p95 = scmp.eq.s32.totalorder %s15, 5
      %p96 = scmp.ne.s32.totalorder %s91, %s93
      %p97 = scmp.eq.s32.totalorder %s15, 0
      %p98 = por %p96, %p97
      %p99 = scmp.ne.s32.totalorder %s91, %s93
      %p100 = scmp.eq.s32.totalorder %s20, 5
      %p101 = por %p99, %p100
      %p102 = scmp.ne.s32.totalorder %s93, %s94
      %p103 = scmp.eq.s32.totalorder %s20, 0
      %p104 = por %p102, %p103
      %p105 = scmp.ne.s32.totalorder %s93, %s94
      %p106 = scmp.eq.s32.totalorder %s21, 5
      %p107 = por %p105, %p106
      %p109 = scmp.ne.s32.totalorder %s94, %s108
      %p110 = scmp.eq.s32.totalorder %s21, 0
      %p111 = por %p109, %p110
      %p112 = scmp.le.s32.totalorder 1, %s15
      %p113 = scmp.lt.s32.totalorder %s15, 7
      %p114 = pnand %p112, %p113
      %p115 = pneg %p114
      // Predicated region
      $region9: #{tpu_custom_call.1} parent=5 // pred_check
        _
      $region10: #{tpu_custom_call.1} parent=5 // pred_check_branch
        %117 = sbr.rel (%p114) target = $region12
      $region11: #{tpu_custom_call.1} parent=5 // pred_region
        %s118 = ssub.s32 %s15, 1
        // Predicated region
        $region13: #{tpu_custom_call.1} parent=11 // pred_check
          %p119 = pneg %p36
        $region14: #{tpu_custom_call.1} parent=11 // pred_check_branch
          %121 = sbr.rel (%p119) target = $region16
        $region15: #{tpu_custom_call.1} parent=11 // pred_region
          %s123 = ssub.s32 16, 16
          %124 = vsyncadd [#allocation5], %s123
          %127 = dma.hbm_to_smem %s0, 16, [#allocation3], [#allocation5]
        $region16: #{tpu_custom_call.1} parent=11 // pred_fallthru
          _
        // Predicated region
        $region17: #{tpu_custom_call.1} parent=11 // pred_check
          %p128 = pneg %p57
        $region18: #{tpu_custom_call.1} parent=11 // pred_check_branch
          %130 = sbr.rel (%p128) target = $region20
        $region19: #{tpu_custom_call.1} parent=11 // pred_region
          %s132 = ssub.s32 16, 16
          %133 = vsyncadd [#allocation7], %s132
          %s135 = sshll.u32 %s1, 4
          %s136 = int_to_ptr.vmem [resolvable:$true] %s135
          %138 = dma.vmem_to_smem %s136, 16, [#allocation8], [#allocation7]
        $region20: #{tpu_custom_call.1} parent=11 // pred_fallthru
          _
      $region12: #{tpu_custom_call.1} parent=5 // pred_fallthru
        _
      %p139 = scmp.lt.s32.totalorder %s15, 6
      // Predicated region
      $region21: #{tpu_custom_call.1} parent=5 // pred_check
        %p140 = pneg %p139
      $region22: #{tpu_custom_call.1} parent=5 // pred_check_branch
        %142 = sbr.rel (%p140) target = $region24
      $region23: #{tpu_custom_call.1} parent=5 // pred_region
        // Predicated region
        $region25: #{tpu_custom_call.1} parent=23 // pred_check
          %p143 = pneg %p77
        $region26: #{tpu_custom_call.1} parent=23 // pred_check_branch
          %145 = sbr.rel (%p143) target = $region28
        $region27: #{tpu_custom_call.1} parent=23 // pred_region
          %s146 = sand.u32 %s67, 1
          %s147 = scalar_lea.sflag [#allocation4], %s146
          %s148 = sand.u32 %s67, 1
          %s149 = smul.addr %s148, 16
          %s150 = scalar_lea.vmem [#allocation9], %s149
          %s151 = smul.u32 2, %s15
          %s153 = ssub.s32 256, 256
          %154 = vsyncadd %s147, %s153
          %s155 = smul.addr %s151, 128
          %s156 = scalar_lea.hbm %s2, %s155
          %s157 = sshll.u32 %s150, 4
          %s158 = int_to_ptr.vmem [resolvable:$true] %s157
          %163 = dma.hbm_to_vmem [thread:$0]  %s156, 256, %s158, %s147, 128, 128, 8
        $region28: #{tpu_custom_call.1} parent=23 // pred_fallthru
          _
      $region24: #{tpu_custom_call.1} parent=5 // pred_fallthru
        _
      %p164 = scmp.le.s32.totalorder 1, %s15
      %p165 = scmp.lt.s32.totalorder %s15, 7
      %p166 = pnand %p164, %p165
      %p167 = pneg %p166
      // Predicated region
      $region29: #{tpu_custom_call.1} parent=5 // pred_check
        _
      $region30: #{tpu_custom_call.1} parent=5 // pred_check_branch
        %169 = sbr.rel (%p166) target = $region32
      $region31: #{tpu_custom_call.1} parent=5 // pred_region
        %s170 = ssub.s32 %s15, 1
        // Predicated region
        $region33: #{tpu_custom_call.1} parent=31 // pred_check
          %p171 = pneg %p36
        $region34: #{tpu_custom_call.1} parent=31 // pred_check_branch
          %173 = sbr.rel (%p171) target = $region36
        $region35: #{tpu_custom_call.1} parent=31 // pred_region
          %174 = dma.done [#allocation5], 16
        $region36: #{tpu_custom_call.1} parent=31 // pred_fallthru
          _
        // Predicated region
        $region37: #{tpu_custom_call.1} parent=31 // pred_check
          %p175 = pneg %p57
        $region38: #{tpu_custom_call.1} parent=31 // pred_check_branch
          %177 = sbr.rel (%p175) target = $region40
        $region39: #{tpu_custom_call.1} parent=31 // pred_region
          %178 = dma.done [#allocation7], 16
        $region40: #{tpu_custom_call.1} parent=31 // pred_fallthru
          _
        %s179 = sand.u32 %s70, 1
        %s180 = scalar_lea.sflag [#allocation4], %s179
        %s181 = sand.u32 %s70, 1
        %s182 = smul.addr %s181, 16
        %s183 = scalar_lea.vmem [#allocation9], %s182
        // Predicated region
        $region41: #{tpu_custom_call.1} parent=31 // pred_check
          %p184 = pneg %p83
        $region42: #{tpu_custom_call.1} parent=31 // pred_check_branch
          %186 = sbr.rel (%p184) target = $region44
        $region43: #{tpu_custom_call.1} parent=31 // pred_region
          %187 = dma.done %s180, 256
        $region44: #{tpu_custom_call.1} parent=31 // pred_fallthru
          _
        %188 = sfence
        %p189 = pneg %p36
        %p190 = pneg %p33
        %p191 = pneg %p57
        %p192 = pneg %p54
        %s193 = sand.u32 %s70, 1
        %s194 = scalar_lea.sflag [#allocation4], %s193
        %s195 = sand.u32 %s70, 1
        %s196 = smul.addr %s195, 16
        %s197 = scalar_lea.vmem [#allocation9], %s196
        %p198 = pneg %p83
        %p199 = pneg %p80
        %p200 = pneg %p104
        %p201 = pneg %p101
        %s202 = smul.u32 2, %s20
        %p203 = scmp.eq.s32.totalorder %s20, 0
        // Predicated region
        $region45: #{tpu_custom_call.1} parent=31 // pred_check
          %p204 = pneg %p203
        $region46: #{tpu_custom_call.1} parent=31 // pred_check_branch
          %206 = sbr.rel (%p204) target = $region48
        $region47: #{tpu_custom_call.1} parent=31 // pred_region
          %207 = vst [vmem:[#allocation2] sm:$0xff] 0.0
        $region48: #{tpu_custom_call.1} parent=31 // pred_fallthru
          _
        %s208 = sld [smem:[#allocation3 + %s20]]
        %s209 = sld [smem:[#allocation8 + %s20]]
        %v210 = vld [vmem:[%s183] sm:$0xff]
        %v211 = vld [vmem:[%s183 + $0x8] sm:$0xff]
        %v212 = vstv %s208
        %v213 = vsub.f32 %v210, %v212
        %v214 = vsub.f32 %v211, %v212
        %v215 = vmul.f32 %v213, %v213
        %v216 = vmul.f32 %v214, %v214
        %v217 = vstv %s209
        %v218 = vmul.f32 %v215, %v217
        %v219 = vmul.f32 %v216, %v217
        %v220 = vld [vmem:[#allocation2] sm:$0xff]
        %v221 = vadd.f32 %v218, %v219
        %v222 = vadd.f32 %v220, %v221
        %223 = vst [vmem:[#allocation2] sm:$0xff] %v222
        %p224 = scmp.eq.s32.totalorder %s20, 5
        // Predicated region
        $region49: #{tpu_custom_call.1} parent=31 // pred_check
          %p225 = pneg %p224
        $region50: #{tpu_custom_call.1} parent=31 // pred_check_branch
          %227 = sbr.rel (%p225) target = $region52
        $region51: #{tpu_custom_call.1} parent=31 // pred_region
          %v228 = vld [vmem:[#allocation2] sm:$0xff]
          %229 = vadd.xlane.f32.xlu0 %v228
          %v230 = vpop.xlane.xlu0 %229
          %v231 = vrot.slane %v230, 4
          %v232 = vadd.f32 %v230, %v231
          %v233 = vrot.slane %v232, 2
          %v234 = vadd.f32 %v232, %v233
          %v235 = vrot.slane %v234, 1
          %v236 = vadd.f32 %v234, %v235
          %s237 = vtos %v236
          %s238 = scalar_lea.smem [#allocation10], 0
          %239 = sst [smem:[%s238]] %s237
        $region52: #{tpu_custom_call.1} parent=31 // pred_fallthru
          _
        // Predicated region
        $region53: #{tpu_custom_call.1} parent=31 // pred_check
          %p240 = pneg %p101
        $region54: #{tpu_custom_call.1} parent=31 // pred_check_branch
          %242 = sbr.rel (%p240) target = $region56
        $region55: #{tpu_custom_call.1} parent=31 // pred_region
          %s244 = ssub.s32 16, 16
          %245 = vsyncadd [#allocation6], %s244
          %248 = dma.smem_to_hbm [#allocation10], 16, %s3, [#allocation6]
        $region56: #{tpu_custom_call.1} parent=31 // pred_fallthru
          _
        // Predicated region
        $region57: #{tpu_custom_call.1} parent=31 // pred_check
          %p249 = pneg %p101
        $region58: #{tpu_custom_call.1} parent=31 // pred_check_branch
          %251 = sbr.rel (%p249) target = $region60
        $region59: #{tpu_custom_call.1} parent=31 // pred_region
          %252 = dma.done [#allocation6], 16
        $region60: #{tpu_custom_call.1} parent=31 // pred_fallthru
          _
        %253 = sfence
      $region32: #{tpu_custom_call.1} parent=5 // pred_fallthru
        _
      %p254 = scmp.le.s32.totalorder 2, %s15
      // Predicated region
      $region61: #{tpu_custom_call.1} parent=5 // pred_check
        %p255 = pneg %p254
      $region62: #{tpu_custom_call.1} parent=5 // pred_check_branch
        %257 = sbr.rel (%p255) target = $region64
      $region63: #{tpu_custom_call.1} parent=5 // pred_region
        %s258 = ssub.s32 %s15, 2
      $region64: #{tpu_custom_call.1} parent=5 // pred_fallthru
        _
    $region6: #{tpu_custom_call.1} parent=1 // loop_footer
      %s19 = sadd.s32 1, %s15
    $region7: #{tpu_custom_call.1} parent=1 // loop_footer_branch
      %14 = sbr.rel target = $region3
    $region8: #{tpu_custom_call.1} parent=1 // loop_exit
      _
    %259 = vsyncpa [#allocation4], 1
    %s260 = scalar_lea.sflag [#allocation4], 1
    %261 = vsyncpa %s260, 1
    %262 = vsyncpa [#allocation5], 1
    %s263 = scalar_lea.sflag [#allocation5], 1
    %264 = vsyncpa %s263, 1
    %265 = vsyncpa [#allocation6], 1
    %s266 = scalar_lea.sflag [#allocation6], 1
    %267 = vsyncpa %s266, 1
    %268 = vsyncpa [#allocation7], 1
    %s269 = scalar_lea.sflag [#allocation7], 1
    %270 = vsyncpa %s269, 1

</llo_original>
